<compile_context>
chip_gen: v6e
topology: v6e:2x2x1
jax: 0.10.0
libtpu: 0.0.40
codegen_flags: <defaults>
</compile_context>

<pallas_src>
import jax
import jax.numpy as jnp
from jax import lax
from jax.experimental import pallas as pl
from jax.experimental.pallas import tpu as pltpu


# ----------------------------------------------------------------------------
# Fused kernel: normalize(folded) + patch-embed + mask contraction.
#   feat_tile  = raw_patches_tile @ (rsig*W) + bias          [tm, D]  (bf16 out)
#   mask_tile  = me · feat_tile^T   (contract D)             [Np, tm] (lane-dense)
# ----------------------------------------------------------------------------
def _encode_fused_kernel(x_ref, w_ref, b_ref, me_ref, feat_ref, mask_ref):
    acc = jnp.dot(x_ref[...], w_ref[...], preferred_element_type=jnp.float32)
    acc = acc + b_ref[...]
    feat_bf16 = acc.astype(jnp.bfloat16)
    feat_ref[...] = feat_bf16
    # Contract D on BOTH operands (flash-attention q@k^T pattern): D=128 stays
    # on the lane axis of both tiles, output (Np, tm) is lane-dense along tm.
    mask_ref[...] = lax.dot_general(
        me_ref[...], feat_bf16,
        dimension_numbers=(((1,), (1,)), ((), ())),
        preferred_element_type=jnp.float32,
    ).astype(mask_ref.dtype)


def _pick_tile_m(M):
    # Largest 128-aligned tile; only split when there are >= 2 full tiles
    # (the grid is a serial loop on one TC of v5e/v6e — splitting tiny M just
    # adds ~0.35us/step overhead).  tm=4096 double-buffered is ~5.5 MiB: well
    # inside v5e's 16 MiB scoped-VMEM default and v7x's 64 MiB physical VMEM.
    for tm in (4096, 2048, 1024, 512, 256, 128):
        if M % tm == 0 and M >= 2 * tm:
            return tm
    return M  # no split (block == full dim is always a legal BlockSpec)


def encode_and_mask(patches_raw_bf16, w_folded, bias, me, *, mask_dtype=jnp.bfloat16):
    """patches_raw_bf16: [M, K] raw pixels (bf16); w_folded: [K, D]; bias: [D];
    me: [Np, D]  ->  (feat [M, D] bf16, mask [Np, M] mask_dtype)."""
    M, K = patches_raw_bf16.shape
    K2, D = w_folded.shape
    assert K == K2
    Np = me.shape[0]
    tm = _pick_tile_m(M)
    assert M % tm == 0, (M, tm)
    # TODO(synk): if a profile still shows exposed DMA on the patches stream,
    # add pipeline_mode=pl.Buffered(3) on in_specs[0] only.
    return pl.pallas_call(
        _encode_fused_kernel,
        out_shape=(
            jax.ShapeDtypeStruct((M, D), jnp.bfloat16),
            jax.ShapeDtypeStruct((Np, M), mask_dtype),
        ),
        grid=(M // tm,),
        in_specs=[
            pl.BlockSpec((tm, K), lambda i: (i, 0)),      # streamed patches
            pl.BlockSpec((K, D), lambda i: (0, 0)),       # resident weights
            pl.BlockSpec((1, D), lambda i: (0, 0)),       # resident bias
            pl.BlockSpec((Np, D), lambda i: (0, 0)),      # resident mask embeds
        ],
        out_specs=(
            pl.BlockSpec((tm, D), lambda i: (i, 0)),      # feat
            pl.BlockSpec((Np, tm), lambda i: (0, i)),     # mask (lane-dense in tm)
        ),
        compiler_params=pltpu.CompilerParams(dimension_semantics=("parallel",)),
    )(
        patches_raw_bf16,
        w_folded.astype(jnp.bfloat16),
        bias.reshape(1, D).astype(jnp.float32),
        me.astype(jnp.bfloat16),
    )


# ----------------------------------------------------------------------------
# Prompt-encoder stand-in (sin/cos point encoding), plain JAX.
# The (Np,2)@(2,D/2) contraction (K=2) is a terrible MXU shape; as a broadcast
# multiply-add it is ~free and avoids a pallas_call launch for ~4 KiB of output.
# ----------------------------------------------------------------------------
def prompt_encoder(points01, w_pe):
    proj = points01[:, 0:1] * w_pe[0][None, :] + points01[:, 1:2] * w_pe[1][None, :]
    proj = 2.0 * jnp.pi * proj
    return jnp.concatenate([jnp.sin(proj), jnp.cos(proj)], axis=-1)  # [Np, D] f32


# ----------------------------------------------------------------------------
# ImageTokenizer forward (get_inputs -> get_features -> get_outputs), fused.
# ----------------------------------------------------------------------------
class ImageTokenizerPallas:
    PIXEL_MEAN = (103.53, 116.28, 123.675)
    PIXEL_STD = (57.375, 57.12, 58.395)

    def __init__(self, *, patch=8, embed_dim=128, num_mask_tokens=4, num_points=8,
                 mask_pred_dtype=jnp.bfloat16):
        self.patch = patch
        self.embed_dim = embed_dim
        self.num_mask_tokens = num_mask_tokens
        self.num_points = num_points
        self.mask_pred_dtype = mask_pred_dtype
        self.pixel_mean = jnp.asarray(self.PIXEL_MEAN, jnp.float32)
        self.pixel_rsig = 1.0 / jnp.asarray(self.PIXEL_STD, jnp.float32)

        # TODO(synk): image_encoder / prompt_encoder / image_decoder are injected
        # nn.Modules with no architecture defined in the reference file;
        # deterministic stand-in weights are created instead of a checkpoint.
        key = jax.random.PRNGKey(0)
        k1, k2, k3, k4 = jax.random.split(key, 4)
        kin = patch * patch * 3
        self.w_patch = jax.random.normal(k1, (kin, embed_dim), jnp.float32) * 0.02
        self.w_pe = jax.random.normal(k2, (2, embed_dim // 2), jnp.float32)
        self.w_mask = jax.random.normal(k3, (embed_dim, embed_dim), jnp.float32) * 0.02
        self.w_iou = jax.random.normal(k4, (embed_dim, num_mask_tokens), jnp.float32) * 0.02

        # Fold get_inputs' affine normalization into the patch-embed weights:
        #   ((x - mean) * rsig) @ W  ==  x @ (rsig * W) + bias
        # Patch rows are channel-fastest, so tile mean/rsig P*P times.
        mean_t = jnp.tile(self.pixel_mean, patch * patch)        # [P*P*3]
        rsig_t = jnp.tile(self.pixel_rsig, patch * patch)        # [P*P*3]
        self.w_patch_folded = self.w_patch * rsig_t[:, None]     # [P*P*3, D]
        self.b_patch = -(mean_t * rsig_t) @ self.w_patch         # [D]

        # jit so the patch-extraction relayout fuses with the bf16 cast and all
        # glue (reshapes, prompt encoder, broadcasts) dispatch as one program.
        self._forward_jit = jax.jit(self._forward_impl)

    def _forward_impl(self, img, points01):
        B, H, W, C = img.shape
        P, D = self.patch, self.embed_dim
        Hp, Wp = H // P, W // P
        Np = points01.shape[0]

        # --- get_inputs: normalization folded into encoder weights; the
        #     NHWC->NCHW permute of the reference is cosmetic and skipped. ---
        # --- get_features: patch extraction (single relayout, fused with the
        #     bf16 cast under jit) + fused normalize+embed(+mask) kernel. ---
        # TODO(synk): the patch-extraction relayout could be pulled into the
        # kernel with a (b, hp) grid over contiguous (P, W, C) row strips.
        x = img.astype(jnp.bfloat16)
        patches = (x.reshape(B, Hp, P, Wp, P, C)
                    .transpose(0, 1, 3, 2, 4, 5)
                    .reshape(B * Hp * Wp, P * P * C))            # [M, K] raw pixels

        # --- get_outputs prompt path (grid-invariant, hoisted out of the kernel) ---
        sparse = prompt_encoder(points01, self.w_pe)             # [Np, D] f32
        me = sparse @ self.w_mask                                # [Np, D] f32
        iou = sparse @ self.w_iou                                # [Np, K] f32

        feat_flat, mask_flat = encode_and_mask(
            patches, self.w_patch_folded, self.b_patch, me,
            mask_dtype=self.mask_pred_dtype)                     # [M,D] bf16, [Np,M]

        feat = feat_flat.reshape(B, Hp, Wp, D)                   # channel-last, bf16
        img_embeds = feat[:, None]                               # [B, 1, Hp, Wp, D]
        mask_pred = mask_flat.reshape(Np, B, Hp, Wp).transpose(1, 0, 2, 3)
        # TODO(synk): iou is batch-invariant in this stand-in decoder; the real
        # injected decoder would produce num_mask_tokens masks per prompt.
        iou_pred = jnp.broadcast_to(iou[None], (B, Np, iou.shape[-1]))

        return {
            "mask_pred": mask_pred,
            "iou_pred": iou_pred,
            "sparse_embeds": sparse,
            "img_embeds": img_embeds,
        }

    def forward(self, inputs):
        img = jnp.asarray(inputs["img"]).astype(jnp.float32)     # NHWC raw pixels
        points01 = jnp.asarray(inputs["points"]).astype(jnp.float32)
        return self._forward_jit(img, points01)


# ----------------------------------------------------------------------------
# Pure-JAX f32 reference with the UNFUSED normalization (verifies the fold).
# ----------------------------------------------------------------------------
def reference_forward(model, img, points01):
    B, H, W, C = img.shape
    P, D = model.patch, model.embed_dim
    Hp, Wp = H // P, W // P
    norm = (img.astype(jnp.float32) - model.pixel_mean) * model.pixel_rsig
    patches = (norm.reshape(B, Hp, P, Wp, P, C)
                   .transpose(0, 1, 3, 2, 4, 5)
                   .reshape(B * Hp * Wp, P * P * C))
    feat = (patches @ model.w_patch).reshape(B, Hp, Wp, D)
    img_feats = feat.reshape(B, Hp * Wp, D)
    proj = 2.0 * jnp.pi * (points01 @ model.w_pe)
    sparse = jnp.concatenate([jnp.sin(proj), jnp.cos(proj)], axis=-1)
    me = sparse @ model.w_mask
    mask = jnp.einsum("nd,bhd->bnh", me, img_feats).reshape(B, -1, Hp, Wp)
    iou = jnp.broadcast_to((sparse @ model.w_iou)[None], (B, sparse.shape[0], model.num_mask_tokens))
    return {"mask_pred": mask, "iou_pred": iou,
            "sparse_embeds": sparse, "img_embeds": feat[:, None]}


if __name__ == "__main__":
    key = jax.random.PRNGKey(0)
    k_img, _ = jax.random.split(key)

    B, H, W, C = 2, 32, 32, 3
    img = jax.random.uniform(k_img, (B, H, W, C), jnp.float32, 0.0, 255.0)

    model = ImageTokenizerPallas(patch=8, embed_dim=128, num_mask_tokens=4, num_points=8)

    # deterministic prompt points (8 points in [0,1]^2)
    Np = model.num_points
    pts = jnp.linspace(0.0625, 0.9375, Np, dtype=jnp.float32)
    points01 = jnp.stack([pts, pts[::-1]], axis=-1)              # [Np, 2]

    outputs = model.forward({"img": img, "points": points01})
    jax.block_until_ready(outputs)

    # shape checks
    assert outputs["mask_pred"].shape == (B, Np, H // 8, W // 8)
    assert outputs["iou_pred"].shape == (B, Np, 4)
    assert outputs["sparse_embeds"].shape == (Np, 128)
    assert outputs["img_embeds"].shape == (B, 1, H // 8, W // 8, 128)

    # numeric checks vs. unfused f32 reference (bf16 MXU operands -> loose tolerances)
    ref = reference_forward(model, img, points01)
    assert jnp.allclose(outputs["sparse_embeds"], ref["sparse_embeds"], atol=1e-5, rtol=1e-5)
    assert jnp.allclose(outputs["iou_pred"], ref["iou_pred"], atol=1e-4, rtol=1e-4)
    assert jnp.allclose(outputs["img_embeds"].astype(jnp.float32), ref["img_embeds"],
                        atol=2e-2, rtol=2e-2)
    assert jnp.allclose(outputs["mask_pred"].astype(jnp.float32), ref["mask_pred"],
                        atol=6e-2, rtol=6e-2)

    print("KERNEL_OK")
</pallas_src>

<mosaic_0001>
module attributes {stable_mosaic.version = 11 : i64} {
  func.func @_encode_fused_kernel(%arg0: i32, %arg1: memref<32x192xbf16, #tpu.memory_space<vmem>>, %arg2: memref<192x128xbf16, #tpu.memory_space<vmem>>, %arg3: memref<1x128xf32, #tpu.memory_space<vmem>>, %arg4: memref<8x128xbf16, #tpu.memory_space<vmem>>, %arg5: memref<32x128xbf16, #tpu.memory_space<vmem>>, %arg6: memref<8x32xbf16, #tpu.memory_space<vmem>>) attributes {dimension_semantics = [#tpu.dimension_semantics<parallel>], iteration_bounds = array<i64: 1>, scalar_prefetch = 0 : i64, scratch_operands = 0 : i64, tpu.core_type = #tpu.core_type<tc>, window_params = [{transform_indices = @transform_0, window_bounds = array<i64: 32, 192>}, {pipeline_mode = #tpu.pipeline_mode<synchronous>, transform_indices = @transform_1, window_bounds = array<i64: 192, 128>}, {pipeline_mode = #tpu.pipeline_mode<synchronous>, transform_indices = @transform_2, window_bounds = array<i64: 1, 128>}, {pipeline_mode = #tpu.pipeline_mode<synchronous>, transform_indices = @transform_3, window_bounds = array<i64: 8, 128>}, {transform_indices = @transform_4, window_bounds = array<i64: 32, 128>}, {transform_indices = @transform_5, window_bounds = array<i64: 8, 32>}]} {
    %c0 = arith.constant 0 : index
    %c0_0 = arith.constant 0 : index
    %0 = vector.load %arg1[%c0, %c0_0] : memref<32x192xbf16, #tpu.memory_space<vmem>>, vector<32x192xbf16>
    %c0_1 = arith.constant 0 : index
    %c0_2 = arith.constant 0 : index
    %1 = vector.load %arg2[%c0_1, %c0_2] : memref<192x128xbf16, #tpu.memory_space<vmem>>, vector<192x128xbf16>
    %cst = arith.constant dense<0.000000e+00> : vector<32x128xf32>
    %2 = tpu.matmul %0, %1, %cst {dimension_numbers = #tpu.dot_dimension_numbers<[1], [0], [0], [1], [0, 0, 1, 1], [], []>} : vector<32x192xbf16>, vector<192x128xbf16>, vector<32x128xf32> -> vector<32x128xf32>
    %c0_3 = arith.constant 0 : index
    %c0_4 = arith.constant 0 : index
    %3 = vector.load %arg3[%c0_3, %c0_4] : memref<1x128xf32, #tpu.memory_space<vmem>>, vector<1x128xf32>
    %4 = vector.broadcast %3 : vector<1x128xf32> to vector<32x128xf32>
    %5 = arith.addf %2, %4 : vector<32x128xf32>
    %6 = arith.truncf %5 : vector<32x128xf32> to vector<32x128xbf16>
    %c0_5 = arith.constant 0 : index
    %c0_6 = arith.constant 0 : index
    %7 = vector.load %arg5[%c0_5, %c0_6] : memref<32x128xbf16, #tpu.memory_space<vmem>>, vector<32x128xbf16>
    tpu.vector_store %arg5[%c0_5, %c0_6], %6 {strides = array<i32>} : memref<32x128xbf16, #tpu.memory_space<vmem>>, vector<32x128xbf16>,
    %c0_7 = arith.constant 0 : index
    %c0_8 = arith.constant 0 : index
    %8 = vector.load %arg4[%c0_7, %c0_8] : memref<8x128xbf16, #tpu.memory_space<vmem>>, vector<8x128xbf16>
    %cst_9 = arith.constant dense<0.000000e+00> : vector<8x32xf32>
    %9 = tpu.matmul %8, %6, %cst_9 {dimension_numbers = #tpu.dot_dimension_numbers<[1], [1], [0], [0], [0, 0, 1, 0], [], []>} : vector<8x128xbf16>, vector<32x128xbf16>, vector<8x32xf32> -> vector<8x32xf32>
    %10 = arith.truncf %9 : vector<8x32xf32> to vector<8x32xbf16>
    %c0_10 = arith.constant 0 : index
    %c0_11 = arith.constant 0 : index
    %11 = vector.load %arg6[%c0_10, %c0_11] : memref<8x32xbf16, #tpu.memory_space<vmem>>, vector<8x32xbf16>
    tpu.vector_store %arg6[%c0_10, %c0_11], %10 {strides = array<i32>} : memref<8x32xbf16, #tpu.memory_space<vmem>>, vector<8x32xbf16>,
    return
  }
  func.func @transform_0(%arg0: i32) -> (i32, i32) {
    %c0_i32 = arith.constant 0 : i32
    %c0_i32_0 = arith.constant 0 : i32
    return %arg0, %c0_i32 : i32, i32
  }
  func.func @transform_1(%arg0: i32) -> (i32, i32) {
    %c0_i32 = arith.constant 0 : i32
    %c0_i32_0 = arith.constant 0 : i32
    %c0_i32_1 = arith.constant 0 : i32
    return %c0_i32, %c0_i32_0 : i32, i32
  }
  func.func @transform_2(%arg0: i32) -> (i32, i32) {
    %c0_i32 = arith.constant 0 : i32
    %c0_i32_0 = arith.constant 0 : i32
    %c0_i32_1 = arith.constant 0 : i32
    return %c0_i32, %c0_i32_0 : i32, i32
  }
  func.func @transform_3(%arg0: i32) -> (i32, i32) {
    %c0_i32 = arith.constant 0 : i32
    %c0_i32_0 = arith.constant 0 : i32
    %c0_i32_1 = arith.constant 0 : i32
    return %c0_i32, %c0_i32_0 : i32, i32
  }
  func.func @transform_4(%arg0: i32) -> (i32, i32) {
    %c0_i32 = arith.constant 0 : i32
    %c0_i32_0 = arith.constant 0 : i32
    return %arg0, %c0_i32 : i32, i32
  }
  func.func @transform_5(%arg0: i32) -> (i32, i32) {
    %c0_i32 = arith.constant 0 : i32
    %c0_i32_0 = arith.constant 0 : i32
    return %c0_i32, %arg0 : i32, i32
  }
}

</mosaic_0001>

<llo_original>
// kernel: _forward_impl.1
$region0: #{_forward_impl.1}
  #allocation0 [shape = 'u32[]', space=smem, size = 0x4, offset = 0x4, fixed_abs, tag = 'smem constant byte address 0x4 - core index']
  #allocation1 [shape = 'u32[144,128]{1,0:T(1,128)}', space=vmem, size = 0x12000, scoped, tag = 'internal scratch']
  %s0 = inlined_call_operand.vmem [shape: bf16[32,192], index: 0, kind: input, shape index: {}]
  %s1 = inlined_call_operand.vmem [shape: bf16[192,128], index: 1, kind: input, shape index: {}]
  %s2 = inlined_call_operand.vmem [shape: f32[1,128], index: 2, kind: input, shape index: {}]
  %s3 = inlined_call_operand.vmem [shape: bf16[8,128], index: 3, kind: input, shape index: {}]
  %s4 = inlined_call_operand.hbm [shape: bf16[32,128], index: 4, kind: output, shape index: {0}]
  %s5 = inlined_call_operand.vmem [shape: bf16[8,32], index: 5, kind: output, shape index: {1}]
  %6 = xla_tuple %s4, %s5
  %s7 = sld [smem:[#allocation0]]
  $region34: #{_forward_impl.1} parent=0
    _
  %s9 = ssub.s32 1, %s7
  %s10 = scalar_select 0, %s9, %s7
  $region1: #{_forward_impl.1} parent=0
    #allocation2 [shape = 'u8[8192]{0}', space=vmem, size = 0x2000, scoped, tag = 'output window, operand 0, single buffered']
    #allocation3 [shape = 's32[1]{0}', space=sflag, size = 0x4, scoped, tag = 'scoped memory for _forward_impl.1']
    %11 = vsyncpa [#allocation3], 0
    // Predicated region
    $region2: #{_forward_impl.1} parent=1 // pred_check
      _
    $region3: #{_forward_impl.1} parent=1 // pred_check_branch
      %13 = sbr.rel (0) target = $region5
    $region4: #{_forward_impl.1} parent=1 // pred_region
      _
    $region5: #{_forward_impl.1} parent=1 // pred_fallthru
      _
    // Predicated region
    $region6: #{_forward_impl.1} parent=1 // pred_check
      _
    $region7: #{_forward_impl.1} parent=1 // pred_check_branch
      %15 = sbr.rel (0) target = $region9
    $region8: #{_forward_impl.1} parent=1 // pred_region
      _
    $region9: #{_forward_impl.1} parent=1 // pred_fallthru
      _
    // Predicated region
    $region10: #{_forward_impl.1} parent=1 // pred_check
      _
    $region11: #{_forward_impl.1} parent=1 // pred_check_branch
      %17 = sbr.rel (0) target = $region13
    $region12: #{_forward_impl.1} parent=1 // pred_region
      _
    $region13: #{_forward_impl.1} parent=1 // pred_fallthru
      _
    // Predicated region
    $region14: #{_forward_impl.1} parent=1 // pred_check
      _
    $region15: #{_forward_impl.1} parent=1 // pred_check_branch
      %19 = sbr.rel (0) target = $region17
    $region16: #{_forward_impl.1} parent=1 // pred_region
      _
    $region17: #{_forward_impl.1} parent=1 // pred_fallthru
      _
    %v21 = vld [vmem:[%s0] sm:$0xff]
    %v22 = vld [vmem:[%s0 + $0x8] sm:$0xff]
    %v23 = vld [vmem:[%s0 + $0x10] sm:$0xff]
    %v24 = vld [vmem:[%s0 + $0x18] sm:$0xff]
    %v25 = vld [vmem:[%s1] sm:$0xf]
    %v26 = vld [vmem:[%s1 + $0x4] sm:$0xf]
    %v27 = vld [vmem:[%s1 + $0x8] sm:$0xf]
    %v28 = vld [vmem:[%s1 + $0xc] sm:$0xf]
    %v29 = vld [vmem:[%s1 + $0x10] sm:$0xf]
    %v30 = vld [vmem:[%s1 + $0x14] sm:$0xf]
    %v31 = vld [vmem:[%s1 + $0x18] sm:$0xf]
    %v32 = vld [vmem:[%s1 + $0x1c] sm:$0xf]
    %v33 = vld [vmem:[%s1 + $0x20] sm:$0xf]
    %v34 = vld [vmem:[%s1 + $0x24] sm:$0xf]
    %v35 = vld [vmem:[%s1 + $0x28] sm:$0xf]
    %v36 = vld [vmem:[%s1 + $0x2c] sm:$0xf]
    %v37 = vld [vmem:[%s1 + $0x30] sm:$0xf]
    %v38 = vld [vmem:[%s1 + $0x34] sm:$0xf]
    %v39 = vld [vmem:[%s1 + $0x38] sm:$0xf]
    %v40 = vld [vmem:[%s1 + $0x3c] sm:$0xf]
    %v41 = vld [vmem:[%s1 + $0x40] sm:$0xf]
    %v42 = vld [vmem:[%s1 + $0x44] sm:$0xf]
    %v43 = vld [vmem:[%s1 + $0x48] sm:$0xf]
    %v44 = vld [vmem:[%s1 + $0x4c] sm:$0xf]
    %v45 = vld [vmem:[%s1 + $0x50] sm:$0xf]
    %v46 = vld [vmem:[%s1 + $0x54] sm:$0xf]
    %v47 = vld [vmem:[%s1 + $0x58] sm:$0xf]
    %v48 = vld [vmem:[%s1 + $0x5c] sm:$0xf]
    %v49 = vld [vmem:[%s2] sm:$0x1]
    %v51 = vlaneseq
    %v52 = vshrl.u32 %v51, 7
    %v53 = vsub.s32 0, %v52
    %v54 = vrot.slane %v49, %v53
    %v60 = vunpack.c.l.b16 %v21
    %v61 = vunpack.c.h.b16 %v21
    %v62 = vunpack.c.l.b16 %v22
    %v63 = vunpack.c.h.b16 %v22
    %v64 = vunpack.c.l.b16 %v23
    %v65 = vunpack.c.h.b16 %v23
    %v66 = vunpack.c.l.b16 %v24
    %v67 = vunpack.c.h.b16 %v24
    %v68 = vpack.c.b16 %v62, %v60
    %v69 = vpack.c.b16 %v63, %v61
    %v70 = vpack.c.b16 %v66, %v64
    %v71 = vpack.c.b16 %v67, %v65
    %v98 = vunpack.c.l.b16 %v25
    %v99 = vunpack.c.l.b16 %v26
    %v100 = vunpack.c.l.b16 %v27
    %v101 = vunpack.c.l.b16 %v28
    %v102 = vunpack.c.l.b16 %v29
    %v103 = vunpack.c.l.b16 %v30
    %v104 = vunpack.c.l.b16 %v31
    %v105 = vunpack.c.l.b16 %v32
    %v106 = vunpack.c.l.b16 %v33
    %v107 = vunpack.c.l.b16 %v34
    %v108 = vunpack.c.l.b16 %v35
    %v109 = vunpack.c.l.b16 %v36
    %v110 = vunpack.c.l.b16 %v37
    %v111 = vunpack.c.l.b16 %v38
    %v112 = vunpack.c.l.b16 %v39
    %v113 = vunpack.c.l.b16 %v40
    %v114 = vunpack.c.l.b16 %v41
    %v115 = vunpack.c.l.b16 %v42
    %v116 = vunpack.c.l.b16 %v43
    %v117 = vunpack.c.l.b16 %v44
    %v118 = vunpack.c.l.b16 %v45
    %v119 = vunpack.c.l.b16 %v46
    %v120 = vunpack.c.l.b16 %v47
    %v121 = vunpack.c.l.b16 %v48
    %v122 = vpack.c.b16 %v99, %v98
    %v123 = vpack.c.b16 %v101, %v100
    %v124 = vpack.c.b16 %v103, %v102
    %v125 = vpack.c.b16 %v105, %v104
    %v126 = vpack.c.b16 %v107, %v106
    %v127 = vpack.c.b16 %v109, %v108
    %v128 = vpack.c.b16 %v111, %v110
    %v129 = vpack.c.b16 %v113, %v112
    %v130 = vpack.c.b16 %v115, %v114
    %v131 = vpack.c.b16 %v117, %v116
    %v132 = vpack.c.b16 %v119, %v118
    %v133 = vpack.c.b16 %v121, %v120
    %vm146 = vcmask 523264
    %v148 = vsel %vm146, %v69, 0
    %v151 = vsel %vm146, %v71, 0
    %153 = vmatprep.subr.bf16.mxu0 0
    %154 = vmatpush1.bf16.msra.mxu0 %v129
    %155 = vmatprep.subr.bf16.mxu0 0
    %156 = vmatpush1.bf16.msra.mxu0 %v128
    %157 = vmatprep.subr.bf16.mxu0 0
    %158 = vmatpush1.bf16.msra.mxu0 %v127
    %159 = vmatprep.subr.bf16.mxu0 0
    %160 = vmatpush1.bf16.msra.mxu0 %v126
    %161 = vmatprep.subr.bf16.mxu0 0
    %162 = vmatpush1.bf16.msra.mxu0 %v125
    %163 = vmatprep.subr.bf16.mxu0 0
    %164 = vmatpush1.bf16.msra.mxu0 %v124
    %165 = vmatprep.subr.bf16.mxu0 0
    %166 = vmatpush1.bf16.msra.mxu0 %v123
    %167 = vmatprep.subr.bf16.mxu0 0
    %168 = vmatpush1.bf16.msra.mxu0 %v122
    %169 = vmatprep.subr.bf16.mxu0 0
    %170 = vmatpush2.bf16.msra.mxu0 0
    %171 = vmatprep.subr.bf16.mxu0 0
    %172 = vmatpush2.bf16.msra.mxu0 0
    %173 = vmatprep.subr.bf16.mxu0 0
    %174 = vmatpush2.bf16.msra.mxu0 0
    %175 = vmatprep.subr.bf16.mxu0 0
    %176 = vmatpush2.bf16.msra.mxu0 0
    %177 = vmatprep.subr.bf16.mxu0 0
    %178 = vmatpush2.bf16.msra.mxu0 %v133
    %179 = vmatprep.subr.bf16.mxu0 0
    %180 = vmatpush2.bf16.msra.mxu0 %v132
    %181 = vmatprep.subr.bf16.mxu0 0
    %182 = vmatpush2.bf16.msra.mxu0 %v131
    %183 = vmatprep.subr.bf16.mxu0 0
    %184 = vmatpush2.bf16.msra.mxu0 %v130
    %185 = vmatprep.mubr.bf16.mxu0 %v148
    %186 = vmatmul.mubr.bf16.gmra.mxu0 %v68
    %v187 = vpop.f32.mrf.mxu0
    %v188 = vadd.f32 %v54, %v187
    %v189 = vpop.f32.mrf.mxu0
    %v190 = vpop.f32.mrf.mxu0
    %v191 = vadd.f32 %v54, %v190
    %v192 = vpop.f32.mrf.mxu0
    %193 = vmatprep.mubr.bf16.mxu0 %v151
    %194 = vmatmul.mubr.bf16.gmra.mxu0 %v70
    %v195 = vpop.f32.mrf.mxu0
    %v196 = vadd.f32 %v54, %v195
    %v197 = vpop.f32.mrf.mxu0
    %v198 = vpop.f32.mrf.mxu0
    %v199 = vadd.f32 %v54, %v198
    %v200 = vpop.f32.mrf.mxu0
    %201 = vdwg.mxu0
    %v202 = vpack.c.bf16 %v191, %v188
    %v203 = vpack.c.bf16 %v199, %v196
    %v206 = vunpack.c.l.b16 %v202
    %v207 = vunpack.c.h.b16 %v202
    %v208 = vunpack.c.l.b16 %v203
    %v209 = vunpack.c.h.b16 %v203
    %v210 = vpack.c.b16 %v206, %v206
    %v211 = vpack.c.b16 %v207, %v207
    %v212 = vpack.c.b16 %v208, %v208
    %v213 = vpack.c.b16 %v209, %v209
    %218 = vst [vmem:[#allocation2] sm:$0xf] %v210
    %219 = vst [vmem:[#allocation2 + $0x4] sm:$0xf] %v211
    %220 = vst [vmem:[#allocation2 + $0x8] sm:$0xf] %v212
    %221 = vst [vmem:[#allocation2 + $0xc] sm:$0xf] %v213
    %v222 = vld [vmem:[%s3] sm:$0xf]
    %223 = vmatprep.subr.bf16.mxu0 0
    %224 = vmatpush1.bf16.xpose.msra.mxu0 0
    %225 = vmatprep.subr.bf16.mxu0 0
    %226 = vmatpush1.bf16.xpose.msra.mxu0 0
    %227 = vmatprep.subr.bf16.mxu0 0
    %228 = vmatpush1.bf16.xpose.msra.mxu0 0
    %229 = vmatprep.subr.bf16.mxu0 0
    %230 = vmatpush1.bf16.xpose.msra.mxu0 0
    %231 = vmatprep.subr.bf16.mxu0 0
    %232 = vmatpush1.bf16.xpose.msra.mxu0 0
    %233 = vmatprep.subr.bf16.mxu0 0
    %234 = vmatpush1.bf16.xpose.msra.mxu0 0
    %235 = vmatprep.subr.bf16.mxu0 0
    %236 = vmatpush1.bf16.xpose.msra.mxu0 %v203
    %237 = vmatprep.subr.bf16.mxu0 0
    %238 = vmatpush1.bf16.xpose.msra.mxu0 %v202
    %239 = vmatprep.subr.bf16.mxu0 0
    %240 = vmatpush2.bf16.xpose.msra.mxu0 0
    %241 = vmatprep.subr.bf16.mxu0 0
    %242 = vmatpush2.bf16.xpose.msra.mxu0 0
    %243 = vmatprep.subr.bf16.mxu0 0
    %244 = vmatpush2.bf16.xpose.msra.mxu0 0
    %245 = vmatprep.subr.bf16.mxu0 0
    %246 = vmatpush2.bf16.xpose.msra.mxu0 0
    %247 = vmatprep.subr.bf16.mxu0 0
    %248 = vmatpush2.bf16.xpose.msra.mxu0 0
    %249 = vmatprep.subr.bf16.mxu0 0
    %250 = vmatpush2.bf16.xpose.msra.mxu0 0
    %251 = vmatprep.subr.bf16.mxu0 0
    %252 = vmatpush2.bf16.xpose.msra.mxu0 0
    %253 = vmatprep.subr.bf16.mxu0 0
    %254 = vmatpush2.bf16.xpose.msra.mxu0 0
    %255 = vmatprep.mubr.bf16.mxu0 0
    %256 = vmatmul.mubr.bf16.gmra.mxu0 %v222
    %v257 = vpop.f32.mrf.mxu0
    %v258 = vadd.f32 0.0, %v257
    %v259 = vpop.f32.mrf.mxu0
    %v260 = vpop.f32.mrf.mxu0
    %v261 = vpop.f32.mrf.mxu0
    %262 = vdwg.mxu0
    %v263 = vpack.c.bf16 %v258, %v258
    %vm264 = vcmask 257024
    %265 = vst.msk [vmem:[%s5] sm:$0xf] %vm264, %v263
    // Predicated region
    $region18: #{_forward_impl.1} parent=1 // pred_check
      _
    $region19: #{_forward_impl.1} parent=1 // pred_check_branch
      %267 = sbr.rel (0) target = $region21
    $region20: #{_forward_impl.1} parent=1 // pred_region
      %s269 = ssub.s32 256, 256
      %270 = vsyncadd [#allocation3], %s269
      %s271 = sshll.u32 [#allocation2], 4
      %s272 = int_to_ptr.vmem [resolvable:$true] %s271
      %277 = dma.vmem_to_hbm [thread:$0]  %s272, 256, %s4, [#allocation3], 64, 64, 4
    $region21: #{_forward_impl.1} parent=1 // pred_fallthru
      _
    // Predicated region
    $region22: #{_forward_impl.1} parent=1 // pred_check
      _
    $region23: #{_forward_impl.1} parent=1 // pred_check_branch
      %279 = sbr.rel (0) target = $region25
    $region24: #{_forward_impl.1} parent=1 // pred_region
      _
    $region25: #{_forward_impl.1} parent=1 // pred_fallthru
      _
    // Predicated region
    $region26: #{_forward_impl.1} parent=1 // pred_check
      _
    $region27: #{_forward_impl.1} parent=1 // pred_check_branch
      %281 = sbr.rel (0) target = $region29
    $region28: #{_forward_impl.1} parent=1 // pred_region
      %282 = dma.done [#allocation3], 256
    $region29: #{_forward_impl.1} parent=1 // pred_fallthru
      _
    // Predicated region
    $region30: #{_forward_impl.1} parent=1 // pred_check
      _
    $region31: #{_forward_impl.1} parent=1 // pred_check_branch
      %284 = sbr.rel (0) target = $region33
    $region32: #{_forward_impl.1} parent=1 // pred_region
      _
    $region33: #{_forward_impl.1} parent=1 // pred_fallthru
      _
    %285 = vsyncpa [#allocation3], 1

</llo_original>
